<compile_context>
chip_gen: v5e
topology: v5e:2x2
jax: 0.10.0
libtpu: 0.0.40
codegen_flags: <defaults>
</compile_context>

<pallas_src>
import sys
import functools
import warnings
from abc import ABCMeta, abstractmethod
from copy import copy

import numpy as np
import jax
import jax.numpy as jnp
from jax.experimental import pallas as pl
from jax.experimental.pallas import tpu as pltpu

# benign: donation may emit an advisory warning if XLA cannot reuse the buffer
warnings.filterwarnings("ignore", message=".*donated.*")


# ----------------------------------------------------------------------------
# Pallas kernel: elementwise identity (the only compute a faithful BaseModel
# forward can perform, since _forward is abstract).
# ----------------------------------------------------------------------------
def _identity_kernel(x_ref, o_ref):
    o_ref[...] = x_ref[...]


_LANE = 128
_SUBLANE_FOR_ITEMSIZE = {4: 8, 2: 16, 1: 32}     # f32/i32, bf16/f16, int8/fp8
_TARGET_BLOCK_BYTES = 4 * 1024 * 1024            # ~4 MiB/tile: v7x-safe, roofline-friendly


def _choose_block_rows(rows: int, sublane: int, itemsize: int) -> int:
    """Lane-dense block height: big enough to amortize per-step overhead,
    a multiple of the dtype's sublane packing, and (when the input allows)
    yielding >= 2 grid steps so both v7x TensorCores get work."""
    bytes_per_row = _LANE * itemsize
    max_rows = max(sublane, (_TARGET_BLOCK_BYTES // bytes_per_row) // sublane * sublane)
    if rows <= max_rows:
        if rows >= 2 * sublane:
            half = (rows + 1) // 2
            return ((half + sublane - 1) // sublane) * sublane   # 2-step grid
        return rows                       # block == full dim -> (8,128) rule waived
    return max_rows


def pallas_identity(x: jax.Array, *, in_place: bool = False) -> jax.Array:
    """Elementwise pass-through on TPU via a tiled Pallas kernel.

    No host-side padding or slicing.  If `in_place` is True the output aliases
    the input HBM buffer (pair with jax.jit(..., donate_argnums=0))."""
    if x.size == 0:
        return x

    orig_shape = x.shape
    n = x.size
    itemsize = jnp.dtype(x.dtype).itemsize
    sublane = _SUBLANE_FOR_ITEMSIZE.get(itemsize, 8)

    if n % _LANE == 0:
        rows = n // _LANE
        x2d = x.reshape(rows, _LANE)                 # zero-copy, lane-dense view
        block_rows = _choose_block_rows(rows, sublane, itemsize)
        grid = (pl.cdiv(rows, block_rows),)          # ragged last block is masked
        block_shape = (block_rows, _LANE)
    else:
        # TODO(synk): ragged total sizes take a single full-array block; fine for
        # the small shapes this model sees, a masked-tail grid would be needed
        # for huge non-128-divisible inputs.
        x2d = x.reshape(1, n)
        grid = (1,)
        block_shape = (1, n)                         # block == full array dims -> waived

    out2d = pl.pallas_call(
        _identity_kernel,
        out_shape=jax.ShapeDtypeStruct(x2d.shape, x2d.dtype),
        grid_spec=pltpu.PrefetchScalarGridSpec(
            num_scalar_prefetch=0,
            grid=grid,
            in_specs=[pl.BlockSpec(block_shape, lambda i: (i, 0))],
            out_specs=pl.BlockSpec(block_shape, lambda i: (i, 0)),
        ),
        compiler_params=pltpu.CompilerParams(
            dimension_semantics=("parallel",),
            vmem_limit_bytes=48 * 1024 * 1024,       # covers 2x double-buffered 4 MiB tiles,
                                                     # fits v5e/v6e/v7x budgets
        ),
        input_output_aliases={0: 0} if in_place else {},
    )(x2d)

    return out2d.reshape(orig_shape)


# ----------------------------------------------------------------------------
# BaseModel: exact reproduction of the dispatch / validation semantics.
# ----------------------------------------------------------------------------
class BaseModel(metaclass=ABCMeta):
    default_conf = {}
    required_inputs = []

    def __init__(self, conf):
        """Perform some logic and call the _init method of the child model."""
        self.conf = conf = {**self.default_conf, **conf}
        self.required_inputs = copy(self.required_inputs)
        self._init(conf)
        sys.stdout.flush()

    def forward(self, data):
        """Check the data and call the _forward method of the child model."""
        for key in self.required_inputs:
            assert key in data, 'Missing key {} in data'.format(key)
        return self._forward(data)

    # make the object callable like an nn.Module
    def __call__(self, data):
        return self.forward(data)

    @abstractmethod
    def _init(self, conf):
        """To be implemented by the child class."""
        raise NotImplementedError

    @abstractmethod
    def _forward(self, data):
        """To be implemented by the child class."""
        raise NotImplementedError


# TODO(synk): BaseModel._forward / _init are abstract — the base class defines
# no concrete compute. IdentityModel is a minimal concrete child used only to
# exercise the Pallas hot path; it has no PyTorch counterpart.
class IdentityModel(BaseModel):
    default_conf = {"name": "identity"}
    required_inputs = ["image"]

    def _init(self, conf):
        # No parameters (the base module declares none). Donate the input so
        # the aliased pallas output reuses its HBM buffer.
        self._identity = jax.jit(
            functools.partial(pallas_identity, in_place=True), donate_argnums=0
        )

    def _forward(self, data):
        return {"output": self._identity(data["image"])}


# ----------------------------------------------------------------------------
# Main
# ----------------------------------------------------------------------------
if __name__ == "__main__":
    key = jax.random.PRNGKey(0)
    # NCHW, small shapes: batch=2, channels=4, spatial=16x16
    x = jax.random.normal(key, (2, 4, 16, 16), dtype=jnp.float32)
    x_host = np.asarray(jax.device_get(x))     # host copy (input buffer is donated)

    model = IdentityModel({})
    out = model({"image": x})                  # donates x's device buffer
    y = jax.block_until_ready(out["output"])

    assert y.shape == x_host.shape and y.dtype == x_host.dtype
    assert np.allclose(np.asarray(jax.device_get(y)), x_host), "identity kernel mismatch"

    # Validation logic check: missing required input must raise.
    try:
        model({})
        raise RuntimeError("expected assertion for missing required input")
    except AssertionError:
        pass

    print("KERNEL_OK")
</pallas_src>

<mosaic_0001>
module attributes {stable_mosaic.version = 11 : i64} {
  func.func @_identity_kernel(%arg0: i32, %arg1: memref<8x128xf32, #tpu.memory_space<vmem>>, %arg2: memref<8x128xf32, #tpu.memory_space<vmem>>) attributes {dimension_semantics = [#tpu.dimension_semantics<parallel>], iteration_bounds = array<i64: 2>, scalar_prefetch = 0 : i64, scratch_operands = 0 : i64, tpu.core_type = #tpu.core_type<tc>, window_params = [{transform_indices = @transform_0, window_bounds = array<i64: 8, 128>}, {transform_indices = @transform_1, window_bounds = array<i64: 8, 128>}]} {
    %c0 = arith.constant 0 : index
    %c0_0 = arith.constant 0 : index
    %0 = vector.load %arg1[%c0, %c0_0] : memref<8x128xf32, #tpu.memory_space<vmem>>, vector<8x128xf32>
    %c0_1 = arith.constant 0 : index
    %c0_2 = arith.constant 0 : index
    %1 = vector.load %arg2[%c0_1, %c0_2] : memref<8x128xf32, #tpu.memory_space<vmem>>, vector<8x128xf32>
    tpu.vector_store %arg2[%c0_1, %c0_2], %0 {strides = array<i32>} : memref<8x128xf32, #tpu.memory_space<vmem>>, vector<8x128xf32>,
    return
  }
  func.func @transform_0(%arg0: i32) -> (i32, i32) {
    %c0_i32 = arith.constant 0 : i32
    %c0_i32_0 = arith.constant 0 : i32
    return %arg0, %c0_i32 : i32, i32
  }
  func.func @transform_1(%arg0: i32) -> (i32, i32) {
    %c0_i32 = arith.constant 0 : i32
    %c0_i32_0 = arith.constant 0 : i32
    return %arg0, %c0_i32 : i32, i32
  }
}

</mosaic_0001>

<llo_original>
// kernel: pallas_identity.1
$region0: #{pallas_identity.1}
  #allocation0 [shape = 'u32[]', space=smem, size = 0x4, offset = 0x4, fixed_abs, tag = 'smem constant byte address 0x4 - core index']
  #allocation1 [shape = 'u32[72,128]{1,0:T(1,128)}', space=vmem, size = 0x9000, scoped, tag = 'internal scratch']
  %s0 = inlined_call_operand.vmem [shape: f32[16,128], index: 0, kind: input, shape index: {}, may-alias: {0,1}]
  %s1 = inlined_call_operand.vmem [shape: f32[16,128], index: 1, kind: output, shape index: {}, may-alias: {0,1}]
  %s2 = sld [smem:[#allocation0]]
  $region37: #{pallas_identity.1} parent=0
    _
  %s4 = ssub.s32 1, %s2
  %s5 = scalar_select 0, %s4, %s2
  loop: start=0, step=1, limit=4
  $region2: #{pallas_identity.1} parent=0 // loop_pre_header
    _
  $region3: #{pallas_identity.1} parent=0 // loop_header
    %s7 = sphi 0, %s11
    %p8 = scmp.ge.s32.totalorder %s7, 4
    %s17 = sphi 0, %s19
    %s20 = sphi 0, %s17
    %s21 = sphi 0, %s20
    %s37 = sphi 0, %s21
    %s43 = sphi 0, %s45
    %s46 = sphi 0, %s43
    %s47 = sphi 0, %s46
    %s63 = sphi 0, %s47
  $region4: #{pallas_identity.1} parent=0 // loop_header_branch
    %10 = sbr.rel (%p8) target = $region8
  $region5: #{pallas_identity.1} parent=0 // loop_body
    %s12 = ssub.s32 %s7, 1
    %s13 = ssub.s32 %s7, 2
    %s14 = sadd.s32 %s7, 1
    %s15 = ssub.s32 %s7, %s14
    %p16 = scmp.eq.s32.totalorder %s15, 0
    %s18 = sadd.s32 %s17, 1
    %s19 = scalar_select %p16, %s17, %s18
    %p22 = pneg %p16
    %p23 = scmp.eq.s32.totalorder %s7, 1
    %p24 = por %p22, %p23
    %p25 = scmp.ne.s32.totalorder %s17, %s20
    %p26 = scmp.eq.s32.totalorder %s7, 0
    %p27 = por %p25, %p26
    %p28 = scmp.ne.s32.totalorder %s17, %s20
    %p29 = scmp.eq.s32.totalorder %s12, 1
    %p30 = por %p28, %p29
    %p31 = scmp.ne.s32.totalorder %s20, %s21
    %p32 = scmp.eq.s32.totalorder %s12, 0
    %p33 = por %p31, %p32
    %p34 = scmp.ne.s32.totalorder %s20, %s21
    %p35 = scmp.eq.s32.totalorder %s13, 1
    %p36 = por %p34, %p35
    %p38 = scmp.ne.s32.totalorder %s21, %s37
    %p39 = scmp.eq.s32.totalorder %s13, 0
    %p40 = por %p38, %p39
    %s41 = ssub.s32 %s7, %s14
    %p42 = scmp.eq.s32.totalorder %s41, 0
    %s44 = sadd.s32 %s43, 1
    %s45 = scalar_select %p42, %s43, %s44
    %p48 = pneg %p42
    %p49 = scmp.eq.s32.totalorder %s7, 1
    %p50 = por %p48, %p49
    %p51 = scmp.ne.s32.totalorder %s43, %s46
    %p52 = scmp.eq.s32.totalorder %s7, 0
    %p53 = por %p51, %p52
    %p54 = scmp.ne.s32.totalorder %s43, %s46
    %p55 = scmp.eq.s32.totalorder %s12, 1
    %p56 = por %p54, %p55
    %p57 = scmp.ne.s32.totalorder %s46, %s47
    %p58 = scmp.eq.s32.totalorder %s12, 0
    %p59 = por %p57, %p58
    %p60 = scmp.ne.s32.totalorder %s46, %s47
    %p61 = scmp.eq.s32.totalorder %s13, 1
    %p62 = por %p60, %p61
    %p64 = scmp.ne.s32.totalorder %s47, %s63
    %p65 = scmp.eq.s32.totalorder %s13, 0
    %p66 = por %p64, %p65
    %p67 = scmp.le.s32.totalorder 1, %s7
    %p68 = scmp.lt.s32.totalorder %s7, 3
    %p69 = pnand %p67, %p68
    %p70 = pneg %p69
    // Predicated region
    $region9: #{pallas_identity.1} parent=5 // pred_check
      _
    $region10: #{pallas_identity.1} parent=5 // pred_check_branch
      %72 = sbr.rel (%p69) target = $region12
    $region11: #{pallas_identity.1} parent=5 // pred_region
      %s73 = ssub.s32 %s7, 1
    $region12: #{pallas_identity.1} parent=5 // pred_fallthru
      _
    %p74 = scmp.lt.s32.totalorder %s7, 2
    // Predicated region
    $region13: #{pallas_identity.1} parent=5 // pred_check
      %p75 = pneg %p74
    $region14: #{pallas_identity.1} parent=5 // pred_check_branch
      %77 = sbr.rel (%p75) target = $region16
    $region15: #{pallas_identity.1} parent=5 // pred_region
      // Predicated region
      $region17: #{pallas_identity.1} parent=15 // pred_check
        %p78 = pneg %p27
      $region18: #{pallas_identity.1} parent=15 // pred_check_branch
        %80 = sbr.rel (%p78) target = $region20
      $region19: #{pallas_identity.1} parent=15 // pred_region
        %p81 = scmp.lt.s32.totalorder %s7, 1
        %s82 = scalar_select %p81, %s7, 1
        %s83 = smul.addr %s82, 8
        %s84 = scalar_lea.vmem %s0, %s83
      $region20: #{pallas_identity.1} parent=15 // pred_fallthru
        _
    $region16: #{pallas_identity.1} parent=5 // pred_fallthru
      _
    %p85 = scmp.le.s32.totalorder 1, %s7
    %p86 = scmp.lt.s32.totalorder %s7, 3
    %p87 = pnand %p85, %p86
    %p88 = pneg %p87
    // Predicated region
    $region21: #{pallas_identity.1} parent=5 // pred_check
      _
    $region22: #{pallas_identity.1} parent=5 // pred_check_branch
      %90 = sbr.rel (%p87) target = $region24
    $region23: #{pallas_identity.1} parent=5 // pred_region
      %s91 = ssub.s32 %s7, 1
      %p92 = scmp.lt.s32.totalorder %s12, 1
      %s93 = scalar_select %p92, %s12, 1
      %s94 = smul.addr %s93, 8
      %s95 = scalar_lea.vmem %s0, %s94
      %p96 = pneg %p33
      %p97 = pneg %p30
      %p98 = pneg %p59
      %p99 = pneg %p56
      %p100 = scmp.lt.s32.totalorder %s12, 1
      %s101 = scalar_select %p100, %s12, 1
      %s102 = smul.addr %s101, 8
      %s103 = scalar_lea.vmem %s1, %s102
      %p104 = scmp.lt.s32.totalorder %s12, 1
      %s105 = scalar_select %p104, %s12, 1
      %s106 = smul.addr %s105, 8
      %s107 = scalar_lea.vmem %s0, %s106
      %p108 = scmp.lt.s32.totalorder %s12, 1
      %s109 = scalar_select %p108, %s12, 1
      %s110 = smul.addr %s109, 8
      %s111 = scalar_lea.vmem %s1, %s110
      %v112 = vld [vmem:[%s107] sm:$0xff]
      %113 = vst [vmem:[%s111] sm:$0xff] %v112
      %p114 = scmp.lt.s32.totalorder %s12, 1
      %s115 = scalar_select %p114, %s12, 1
      %s116 = smul.addr %s115, 8
      %s117 = scalar_lea.vmem %s1, %s116
      // Predicated region
      $region25: #{pallas_identity.1} parent=23 // pred_check
        %p118 = pneg %p56
      $region26: #{pallas_identity.1} parent=23 // pred_check_branch
        %120 = sbr.rel (%p118) target = $region28
      $region27: #{pallas_identity.1} parent=23 // pred_region
        _
      $region28: #{pallas_identity.1} parent=23 // pred_fallthru
        _
    $region24: #{pallas_identity.1} parent=5 // pred_fallthru
      _
    %p121 = scmp.le.s32.totalorder 2, %s7
    // Predicated region
    $region29: #{pallas_identity.1} parent=5 // pred_check
      %p122 = pneg %p121
    $region30: #{pallas_identity.1} parent=5 // pred_check_branch
      %124 = sbr.rel (%p122) target = $region32
    $region31: #{pallas_identity.1} parent=5 // pred_region
      %s125 = ssub.s32 %s7, 2
      // Predicated region
      $region33: #{pallas_identity.1} parent=31 // pred_check
        %p126 = pneg %p62
      $region34: #{pallas_identity.1} parent=31 // pred_check_branch
        %128 = sbr.rel (%p126) target = $region36
      $region35: #{pallas_identity.1} parent=31 // pred_region
        %p129 = scmp.lt.s32.totalorder %s13, 1
        %s130 = scalar_select %p129, %s13, 1
        %s131 = smul.addr %s130, 8
        %s132 = scalar_lea.vmem %s1, %s131
      $region36: #{pallas_identity.1} parent=31 // pred_fallthru
        _
    $region32: #{pallas_identity.1} parent=5 // pred_fallthru
      _
  $region6: #{pallas_identity.1} parent=0 // loop_footer
    %s11 = sadd.s32 1, %s7
  $region7: #{pallas_identity.1} parent=0 // loop_footer_branch
    %6 = sbr.rel target = $region3
  $region8: #{pallas_identity.1} parent=0 // loop_exit
    _

</llo_original>
